<compile_context>
chip_gen: v7x
topology: tpu7x:2x2x1
jax: 0.10.0
libtpu: 0.0.40
codegen_flags: <defaults>
</compile_context>

<pallas_src>
import functools

import jax
import jax.numpy as jnp
from jax import lax
from jax.experimental import pallas as pl
from jax.experimental.pallas import tpu as pltpu


def _loss_basic_kernel(colk_ref, rowk_ref, pred_ref, gt_ref, out_ref, *,
                       width, rows_total, block_rows, ragged):
    """One (block_rows, H*W) tile -> one f32 partial sum in out_ref[0, 0]."""
    p = pred_ref[...].astype(jnp.float32)
    g = gt_ref[...].astype(jnp.float32)

    if ragged:
        # Zero the padded (possibly stale) rows of the trailing partial block
        # before any arithmetic, so garbage can never produce NaN/Inf.
        row_ids = (lax.broadcasted_iota(jnp.int32, (block_rows, 1), 0)
                   + pl.program_id(0) * block_rows)
        valid = row_ids < rows_total
        p = jnp.where(valid, p, 0.0)
        g = jnp.where(valid, g, 0.0)

    ck = colk_ref[...]   # (1, H*W): 1.0 where a left  neighbour exists, else 0.0
    rk = rowk_ref[...]   # (1, H*W): 1.0 where an upper neighbour exists, else 0.0

    def tensor_gradient(x):
        # x[n, i*W + j - 1] == pixel (i, j-1); roll wrap only hits masked lanes.
        sw = pltpu.roll(x, shift=1, axis=1) * ck
        # x[n, (i-1)*W + j] == pixel (i-1, j); roll wrap only hits masked lanes.
        sh = pltpu.roll(x, shift=width, axis=1) * rk
        return jnp.abs(sw - x) + jnp.abs(sh - x)

    d = p - g
    # Fused: MSE numerator + L1-of-gradients numerator in one elementwise pass.
    e = d * d + jnp.abs(tensor_gradient(p) - tensor_gradient(g))
    out_ref[0, 0] = jnp.sum(e)


def _choose_block_rows(n, hw, itemsize, target_bytes):
    """Rows per block: a multiple of 8 (or the full axis), ~target_bytes/block."""
    if n <= 8:
        return n
    budget_rows = max(8, (target_bytes // (hw * itemsize)) // 8 * 8)
    return n if n <= budget_rows else budget_rows


def loss_basic(pred, ground_truth, *, target_block_bytes=2 << 20):
    """Pallas implementation of LossBasic.forward. Inputs are NCHW."""
    assert pred.shape == ground_truth.shape
    b, c, h, w = pred.shape
    n = b * c
    hw = h * w

    # Lane-dense packing: free row-major reshape, no transpose, keeps dtype.
    p2 = pred.reshape(n, hw)
    g2 = ground_truth.reshape(n, hw)

    # Boundary keep-masks, built once outside the grid loop, kept resident.
    lane = jnp.arange(hw, dtype=jnp.int32)
    col_keep = ((lane % w) != 0).astype(jnp.float32).reshape(1, hw)
    row_keep = (lane >= w).astype(jnp.float32).reshape(1, hw)

    tb = _choose_block_rows(n, hw, jnp.dtype(pred.dtype).itemsize,
                            target_block_bytes)
    num_blocks = pl.cdiv(n, tb)
    ragged = (n % tb) != 0
    inv_n = 1.0 / float(n * hw)

    # TODO(synk): for very large H*W (a single 8-row block exceeding VMEM) add
    # a second tiling level over H with a one-row halo for the vertical diff.

    kernel = functools.partial(_loss_basic_kernel, width=w, rows_total=n,
                               block_rows=tb, ragged=ragged)

    partials = pl.pallas_call(
        kernel,
        out_shape=jax.ShapeDtypeStruct((num_blocks, 1), jnp.float32),
        grid=(num_blocks,),
        in_specs=[
            pl.BlockSpec((1, hw), lambda i: (0, 0)),    # col keep mask (resident)
            pl.BlockSpec((1, hw), lambda i: (0, 0)),    # row keep mask (resident)
            pl.BlockSpec((tb, hw), lambda i: (i, 0)),   # pred block
            pl.BlockSpec((tb, hw), lambda i: (i, 0)),   # gt block
        ],
        out_specs=pl.BlockSpec((1, 1), lambda i: (i, 0),
                               memory_space=pltpu.MemorySpace.SMEM),
        compiler_params=pltpu.CompilerParams(
            dimension_semantics=("parallel",),        # independent blocks -> megacore
            vmem_limit_bytes=48 * 1024 * 1024),       # headroom for f32/roll temps
    )(col_keep, row_keep, p2, g2)

    # Tiny final reduction + single global normalization in the wrapper.
    return jnp.sum(partials) * inv_n


# --- pure-JAX reference (mirrors the PyTorch code) for validation ---
def _tensor_gradient_ref(img):
    w, h = img.shape[-2], img.shape[-1]
    nb = img.ndim - 2
    l = jnp.pad(img, [(0, 0)] * (nb + 1) + [(1, 0)])
    r = jnp.pad(img, [(0, 0)] * (nb + 1) + [(0, 1)])
    u = jnp.pad(img, [(0, 0)] * nb + [(1, 0), (0, 0)])
    d = jnp.pad(img, [(0, 0)] * nb + [(0, 1), (0, 0)])
    return jnp.abs((l - r)[..., :w, :h]) + jnp.abs((u - d)[..., :w, :h])


def loss_basic_ref(pred, gt):
    mse = jnp.mean((pred - gt) ** 2)
    l1 = jnp.mean(jnp.abs(_tensor_gradient_ref(pred) - _tensor_gradient_ref(gt)))
    return mse + l1


if __name__ == "__main__":
    key = jax.random.PRNGKey(0)
    k1, k2 = jax.random.split(key)

    def check(shape, **kw):
        pred = jax.random.normal(k1, shape, dtype=jnp.float32)
        gt = jax.random.normal(k2, shape, dtype=jnp.float32)
        out = jax.block_until_ready(loss_basic(pred, gt, **kw))
        ref = jax.block_until_ready(loss_basic_ref(pred, gt))
        assert jnp.allclose(out, ref, rtol=1e-5, atol=1e-5), (shape, kw, out, ref)

    # Single resident block (default block budget).
    check((2, 4, 16, 16))
    # Multi-block pipelined path (forces 8-row blocks -> 2 grid steps).
    check((4, 4, 16, 16), target_block_bytes=8 * 16 * 16 * 4)
    # Ragged trailing block (n=12 rows, 8-row blocks -> cdiv grid + row mask).
    check((3, 4, 16, 16), target_block_bytes=8 * 16 * 16 * 4)

    print("KERNEL_OK")
</pallas_src>

<mosaic_0001>
module attributes {stable_mosaic.version = 11 : i64} {
  func.func @_loss_basic_kernel(%arg0: i32, %arg1: memref<1x256xf32, #tpu.memory_space<vmem>>, %arg2: memref<1x256xf32, #tpu.memory_space<vmem>>, %arg3: memref<8x256xf32, #tpu.memory_space<vmem>>, %arg4: memref<8x256xf32, #tpu.memory_space<vmem>>, %arg5: memref<1x1xf32, #tpu.memory_space<smem>>) attributes {dimension_semantics = [#tpu.dimension_semantics<parallel>], iteration_bounds = array<i64: 1>, scalar_prefetch = 0 : i64, scratch_operands = 0 : i64, tpu.core_type = #tpu.core_type<tc>, window_params = [{pipeline_mode = #tpu.pipeline_mode<synchronous>, transform_indices = @transform_0, window_bounds = array<i64: 1, 256>}, {pipeline_mode = #tpu.pipeline_mode<synchronous>, transform_indices = @transform_1, window_bounds = array<i64: 1, 256>}, {transform_indices = @transform_2, window_bounds = array<i64: 8, 256>}, {transform_indices = @transform_3, window_bounds = array<i64: 8, 256>}, {transform_indices = @transform_4, window_bounds = array<i64: 1, 1>}]} {
    %c0 = arith.constant 0 : index
    %c0_0 = arith.constant 0 : index
    %0 = vector.load %arg3[%c0, %c0_0] : memref<8x256xf32, #tpu.memory_space<vmem>>, vector<8x256xf32>
    %c0_1 = arith.constant 0 : index
    %c0_2 = arith.constant 0 : index
    %1 = vector.load %arg4[%c0_1, %c0_2] : memref<8x256xf32, #tpu.memory_space<vmem>>, vector<8x256xf32>
    %c0_3 = arith.constant 0 : index
    %c0_4 = arith.constant 0 : index
    %2 = vector.load %arg1[%c0_3, %c0_4] : memref<1x256xf32, #tpu.memory_space<vmem>>, vector<1x256xf32>
    %c0_5 = arith.constant 0 : index
    %c0_6 = arith.constant 0 : index
    %3 = vector.load %arg2[%c0_5, %c0_6] : memref<1x256xf32, #tpu.memory_space<vmem>>, vector<1x256xf32>
    %4 = arith.subf %0, %1 : vector<8x256xf32>
    %5 = arith.mulf %4, %4 : vector<8x256xf32>
    %c1_i32 = arith.constant 1 : i32
    %6 = tpu.dynamic_rotate %0 by %c1_i32 dim 1 : vector<8x256xf32>, i32 -> vector<8x256xf32>
    %7 = vector.broadcast %2 : vector<1x256xf32> to vector<8x256xf32>
    %8 = arith.mulf %6, %7 : vector<8x256xf32>
    %c16_i32 = arith.constant 16 : i32
    %9 = tpu.dynamic_rotate %0 by %c16_i32 dim 1 : vector<8x256xf32>, i32 -> vector<8x256xf32>
    %10 = vector.broadcast %3 : vector<1x256xf32> to vector<8x256xf32>
    %11 = arith.mulf %9, %10 : vector<8x256xf32>
    %12 = arith.subf %8, %0 : vector<8x256xf32>
    %13 = math.absf %12 : vector<8x256xf32>
    %14 = arith.subf %11, %0 : vector<8x256xf32>
    %15 = math.absf %14 : vector<8x256xf32>
    %16 = arith.addf %13, %15 : vector<8x256xf32>
    %c1_i32_7 = arith.constant 1 : i32
    %17 = tpu.dynamic_rotate %1 by %c1_i32_7 dim 1 : vector<8x256xf32>, i32 -> vector<8x256xf32>
    %18 = vector.broadcast %2 : vector<1x256xf32> to vector<8x256xf32>
    %19 = arith.mulf %17, %18 : vector<8x256xf32>
    %c16_i32_8 = arith.constant 16 : i32
    %20 = tpu.dynamic_rotate %1 by %c16_i32_8 dim 1 : vector<8x256xf32>, i32 -> vector<8x256xf32>
    %21 = vector.broadcast %3 : vector<1x256xf32> to vector<8x256xf32>
    %22 = arith.mulf %20, %21 : vector<8x256xf32>
    %23 = arith.subf %19, %1 : vector<8x256xf32>
    %24 = math.absf %23 : vector<8x256xf32>
    %25 = arith.subf %22, %1 : vector<8x256xf32>
    %26 = math.absf %25 : vector<8x256xf32>
    %27 = arith.addf %24, %26 : vector<8x256xf32>
    %28 = arith.subf %16, %27 : vector<8x256xf32>
    %29 = math.absf %28 : vector<8x256xf32>
    %30 = arith.addf %5, %29 : vector<8x256xf32>
    %31 = vector.shape_cast %30 : vector<8x256xf32> to vector<1x8x256xf32>
    %cst = arith.constant dense<0.000000e+00> : vector<1xf32>
    %32 = vector.multi_reduction <add>, %31, %cst [1, 2] : vector<1x8x256xf32> to vector<1xf32>
    %33 = vector.shape_cast %32 : vector<1xf32> to vector<1x1x1xf32>
    %34 = vector.extract %33[0, 0, 0] : f32 from vector<1x1x1xf32>
    %c0_9 = arith.constant 0 : index
    %c0_10 = arith.constant 0 : index
    %35 = memref.load %arg5[%c0_9, %c0_10] : memref<1x1xf32, #tpu.memory_space<smem>>
    memref.store %34, %arg5[%c0_9, %c0_10] : memref<1x1xf32, #tpu.memory_space<smem>>
    return
  }
  func.func @transform_0(%arg0: i32) -> (i32, i32) {
    %c0_i32 = arith.constant 0 : i32
    %c0_i32_0 = arith.constant 0 : i32
    %c0_i32_1 = arith.constant 0 : i32
    return %c0_i32, %c0_i32_0 : i32, i32
  }
  func.func @transform_1(%arg0: i32) -> (i32, i32) {
    %c0_i32 = arith.constant 0 : i32
    %c0_i32_0 = arith.constant 0 : i32
    %c0_i32_1 = arith.constant 0 : i32
    return %c0_i32, %c0_i32_0 : i32, i32
  }
  func.func @transform_2(%arg0: i32) -> (i32, i32) {
    %c0_i32 = arith.constant 0 : i32
    %c0_i32_0 = arith.constant 0 : i32
    return %arg0, %c0_i32 : i32, i32
  }
  func.func @transform_3(%arg0: i32) -> (i32, i32) {
    %c0_i32 = arith.constant 0 : i32
    %c0_i32_0 = arith.constant 0 : i32
    return %arg0, %c0_i32 : i32, i32
  }
  func.func @transform_4(%arg0: i32) -> (i32, i32) {
    %c0_i32 = arith.constant 0 : i32
    %c0_i32_0 = arith.constant 0 : i32
    return %arg0, %c0_i32 : i32, i32
  }
}

</mosaic_0001>

<llo_original>
// kernel: tpu_custom_call.1
$region0: #{tpu_custom_call.1}
  #allocation0 [shape = 'u32[]', space=smem, size = 0x4, offset = 0x4, fixed_abs, tag = 'smem constant byte address 0x4 - core index']
  #allocation1 [shape = 'u32[144,128]{1,0:T(1,128)}', space=vmem, size = 0x12000, scoped, tag = 'internal scratch']
  %s0 = inlined_call_operand.hbm [shape: f32[1,256], index: 0, kind: input, shape index: {}]
  %s1 = inlined_call_operand.vmem [shape: f32[1,256], index: 1, kind: input, shape index: {}]
  %s2 = inlined_call_operand.hbm [shape: f32[8,256], index: 2, kind: input, shape index: {}]
  %s3 = inlined_call_operand.hbm [shape: f32[8,256], index: 3, kind: input, shape index: {}]
  %s4 = inlined_call_operand.hbm [shape: f32[1,1], index: 4, kind: output, shape index: {}]
  %s5 = sld [smem:[#allocation0]]
  $region38: #{tpu_custom_call.1} parent=0
    _
  %s7 = ssub.s32 1, %s5
  %s8 = scalar_select 0, %s7, %s5
  $region1: #{tpu_custom_call.1} parent=0
    #allocation2 [shape = 'u8[1024]{0}', space=vmem, size = 0x400, scoped, tag = 'input window, operand 0, single buffered']
    #allocation3 [shape = 's32[1]{0}', space=sflag, size = 0x4, scoped, tag = 'scoped memory for tpu_custom_call.1']
    #allocation4 [shape = 's32[1]{0}', space=sflag, size = 0x4, scoped, tag = 'scoped memory for tpu_custom_call.1']
    #allocation5 [shape = 'u8[8192]{0}', space=vmem, size = 0x2000, scoped, tag = 'input window, operand 2, single buffered']
    #allocation6 [shape = 's32[1]{0}', space=sflag, size = 0x4, scoped, tag = 'scoped memory for tpu_custom_call.1']
    #allocation7 [shape = 'u8[8192]{0}', space=vmem, size = 0x2000, scoped, tag = 'input window, operand 3, single buffered']
    #allocation8 [shape = 'u8[512]{0}', space=smem, size = 0x200, scoped, tag = 'output window, operand 0, single buffered']
    %9 = vsyncpa [#allocation3], 0
    %10 = vsyncpa [#allocation6], 0
    %11 = vsyncpa [#allocation4], 0
    // Predicated region
    $region2: #{tpu_custom_call.1} parent=1 // pred_check
      _
    $region3: #{tpu_custom_call.1} parent=1 // pred_check_branch
      %13 = sbr.rel (0) target = $region5
    $region4: #{tpu_custom_call.1} parent=1 // pred_region
      %s15 = ssub.s32 32, 32
      %16 = vsyncadd [#allocation3], %s15
      %s18 = sshll.u32 [#allocation2], 4
      %s19 = int_to_ptr.vmem [resolvable:$true] %s18
      %21 = dma.hbm_to_vmem [thread:$0]  %s0, 32, %s19, [#allocation3]
    $region5: #{tpu_custom_call.1} parent=1 // pred_fallthru
      _
    // Predicated region
    $region6: #{tpu_custom_call.1} parent=1 // pred_check
      _
    $region7: #{tpu_custom_call.1} parent=1 // pred_check_branch
      %23 = sbr.rel (0) target = $region9
    $region8: #{tpu_custom_call.1} parent=1 // pred_region
      _
    $region9: #{tpu_custom_call.1} parent=1 // pred_fallthru
      _
    // Predicated region
    $region10: #{tpu_custom_call.1} parent=1 // pred_check
      _
    $region11: #{tpu_custom_call.1} parent=1 // pred_check_branch
      %25 = sbr.rel (0) target = $region13
    $region12: #{tpu_custom_call.1} parent=1 // pred_region
      %s27 = ssub.s32 256, 256
      %28 = vsyncadd [#allocation6], %s27
      %s30 = sshll.u32 [#allocation5], 4
      %s31 = int_to_ptr.vmem [resolvable:$true] %s30
      %33 = dma.hbm_to_vmem [thread:$0]  %s2, 256, %s31, [#allocation6]
    $region13: #{tpu_custom_call.1} parent=1 // pred_fallthru
      _
    // Predicated region
    $region14: #{tpu_custom_call.1} parent=1 // pred_check
      _
    $region15: #{tpu_custom_call.1} parent=1 // pred_check_branch
      %35 = sbr.rel (0) target = $region17
    $region16: #{tpu_custom_call.1} parent=1 // pred_region
      %s37 = ssub.s32 256, 256
      %38 = vsyncadd [#allocation6], %s37
      %s40 = sshll.u32 [#allocation7], 4
      %s41 = int_to_ptr.vmem [resolvable:$true] %s40
      %43 = dma.hbm_to_vmem [thread:$0]  %s3, 256, %s41, [#allocation6]
    $region17: #{tpu_custom_call.1} parent=1 // pred_fallthru
      _
    // Predicated region
    $region18: #{tpu_custom_call.1} parent=1 // pred_check
      _
    $region19: #{tpu_custom_call.1} parent=1 // pred_check_branch
      %45 = sbr.rel (0) target = $region21
    $region20: #{tpu_custom_call.1} parent=1 // pred_region
      %46 = dma.done [#allocation3], 32
    $region21: #{tpu_custom_call.1} parent=1 // pred_fallthru
      _
    // Predicated region
    $region22: #{tpu_custom_call.1} parent=1 // pred_check
      _
    $region23: #{tpu_custom_call.1} parent=1 // pred_check_branch
      %48 = sbr.rel (0) target = $region25
    $region24: #{tpu_custom_call.1} parent=1 // pred_region
      %49 = dma.done [#allocation6], 256
    $region25: #{tpu_custom_call.1} parent=1 // pred_fallthru
      _
    // Predicated region
    $region26: #{tpu_custom_call.1} parent=1 // pred_check
      _
    $region27: #{tpu_custom_call.1} parent=1 // pred_check_branch
      %51 = sbr.rel (0) target = $region29
    $region28: #{tpu_custom_call.1} parent=1 // pred_region
      %52 = dma.done [#allocation6], 256
    $region29: #{tpu_custom_call.1} parent=1 // pred_fallthru
      _
    %v53 = vld [vmem:[#allocation5] sm:$0xff]
    %v54 = vld [vmem:[#allocation5 + $0x8] sm:$0xff]
    %v55 = vld [vmem:[#allocation7] sm:$0xff]
    %v56 = vld [vmem:[#allocation7 + $0x8] sm:$0xff]
    %v57 = vld [vmem:[#allocation2] sm:$0x3]
    %v58 = vld [vmem:[%s1] sm:$0x3]
    %v59 = vsub.f32 %v53, %v55
    %v60 = vsub.f32 %v54, %v56
    %v61 = vmul.f32 %v59, %v59
    %v62 = vmul.f32 %v60, %v60
    %63 = vrot.lane.b32.xlu0 %v53, 1
    %v64 = vpop.permute.xlu0 %63
    %65 = vrot.lane.b32.xlu0 %v54, 1
    %v66 = vpop.permute.xlu0 %65
    %v67 = vlaneseq
    %v68 = vand.u32 %v67, 127
    %vm69 = vcmp.lt.s32.totalorder %v68, 1
    %v70 = vsel %vm69, %v64, %v66
    %v71 = vsel %vm69, %v66, %v64
    %v73 = vlaneseq
    %v74 = vshrl.u32 %v73, 7
    %v75 = vsub.s32 0, %v74
    %v76 = vrot.slane %v57, %v75
    %v77 = vlaneseq
    %v78 = vshrl.u32 %v77, 7
    %v79 = vsub.s32 1, %v78
    %v80 = vrot.slane %v57, %v79
    %v83 = vmul.f32 %v71, %v76
    %v84 = vmul.f32 %v70, %v80
    %85 = vrot.lane.b32.xlu0 %v53, 16
    %v86 = vpop.permute.xlu0 %85
    %87 = vrot.lane.b32.xlu0 %v54, 16
    %v88 = vpop.permute.xlu0 %87
    %vm89 = vcmp.lt.s32.totalorder %v68, 16
    %v90 = vsel %vm89, %v86, %v88
    %v91 = vsel %vm89, %v88, %v86
    %v93 = vlaneseq
    %v94 = vshrl.u32 %v93, 7
    %v95 = vsub.s32 0, %v94
    %v96 = vrot.slane %v58, %v95
    %v97 = vlaneseq
    %v98 = vshrl.u32 %v97, 7
    %v99 = vsub.s32 1, %v98
    %v100 = vrot.slane %v58, %v99
    %v103 = vmul.f32 %v91, %v96
    %v104 = vmul.f32 %v90, %v100
    %v105 = vsub.f32 %v83, %v53
    %v106 = vsub.f32 %v84, %v54
    %v107 = vand.u32 2147483647, %v105
    %v108 = vand.u32 2147483647, %v106
    %v109 = vsub.f32 %v103, %v53
    %v110 = vsub.f32 %v104, %v54
    %v111 = vand.u32 2147483647, %v109
    %v112 = vand.u32 2147483647, %v110
    %v113 = vadd.f32 %v107, %v111
    %v114 = vadd.f32 %v108, %v112
    %115 = vrot.lane.b32.xlu0 %v55, 1
    %v116 = vpop.permute.xlu0 %115
    %117 = vrot.lane.b32.xlu0 %v56, 1
    %v118 = vpop.permute.xlu0 %117
    %v119 = vsel %vm69, %v116, %v118
    %v120 = vsel %vm69, %v118, %v116
    %v121 = vmul.f32 %v120, %v76
    %v122 = vmul.f32 %v119, %v80
    %123 = vrot.lane.b32.xlu0 %v55, 16
    %v124 = vpop.permute.xlu0 %123
    %125 = vrot.lane.b32.xlu0 %v56, 16
    %v126 = vpop.permute.xlu0 %125
    %v127 = vsel %vm89, %v124, %v126
    %v128 = vsel %vm89, %v126, %v124
    %v129 = vmul.f32 %v128, %v96
    %v130 = vmul.f32 %v127, %v100
    %v131 = vsub.f32 %v121, %v55
    %v132 = vsub.f32 %v122, %v56
    %v133 = vand.u32 2147483647, %v131
    %v134 = vand.u32 2147483647, %v132
    %v135 = vsub.f32 %v129, %v55
    %v136 = vsub.f32 %v130, %v56
    %v137 = vand.u32 2147483647, %v135
    %v138 = vand.u32 2147483647, %v136
    %v139 = vadd.f32 %v133, %v137
    %v140 = vadd.f32 %v134, %v138
    %v141 = vsub.f32 %v113, %v139
    %v142 = vsub.f32 %v114, %v140
    %v143 = vand.u32 2147483647, %v141
    %v144 = vand.u32 2147483647, %v142
    %v145 = vadd.f32 %v61, %v143
    %v146 = vadd.f32 %v62, %v144
    %v147 = vadd.f32 %v145, %v146
    %148 = vadd.xlane.f32.xlu0 %v147
    %v149 = vpop.xlane.xlu0 %148
    %v150 = vrot.slane %v149, 4
    %v151 = vadd.f32 %v149, %v150
    %v152 = vrot.slane %v151, 2
    %v153 = vadd.f32 %v151, %v152
    %v154 = vrot.slane %v153, 1
    %v155 = vadd.f32 %v153, %v154
    %s156 = vtos %v155
    %s157 = scalar_lea.smem [#allocation8], 0
    %158 = sst [smem:[%s157]] %s156
    // Predicated region
    $region30: #{tpu_custom_call.1} parent=1 // pred_check
      _
    $region31: #{tpu_custom_call.1} parent=1 // pred_check_branch
      %160 = sbr.rel (0) target = $region33
    $region32: #{tpu_custom_call.1} parent=1 // pred_region
      %s162 = ssub.s32 16, 16
      %163 = vsyncadd [#allocation4], %s162
      %166 = dma.smem_to_hbm [#allocation8], 16, %s4, [#allocation4]
    $region33: #{tpu_custom_call.1} parent=1 // pred_fallthru
      _
    // Predicated region
    $region34: #{tpu_custom_call.1} parent=1 // pred_check
      _
    $region35: #{tpu_custom_call.1} parent=1 // pred_check_branch
      %168 = sbr.rel (0) target = $region37
    $region36: #{tpu_custom_call.1} parent=1 // pred_region
      %169 = dma.done [#allocation4], 16
    $region37: #{tpu_custom_call.1} parent=1 // pred_fallthru
      _
    %170 = sfence
    %171 = vsyncpa [#allocation3], 1
    %172 = vsyncpa [#allocation6], 1
    %173 = vsyncpa [#allocation4], 1

</llo_original>
